<compile_context>
chip_gen: v7x
topology: tpu7x:2x2x1
jax: 0.10.0
libtpu: 0.0.40
codegen_flags: <defaults>
</compile_context>

<pallas_src>
import functools

import jax
import jax.numpy as jnp
from jax.experimental import pallas as pl
from jax.experimental.pallas import tpu as pltpu

WORD_SIZE = 32   # vocab
EMB_NUM = 16     # embedding dim
HIDDEN = 32      # rnn hidden dim


def pmodel_kernel(xcol_ref, emb_ref, wih_ref, whh_ref, brnn_ref,
                  wcls_ref, bcls_ref, rnn_out_ref, pred_ref, *, batch, seq):
    """Full forward pass in one kernel invocation.

    xcol_ref:    (S*B, 1) int32  token ids, time-major flattened (row = t*B+b)
    emb_ref:     (Vw, E)         embedding table
    wih_ref:     (E, H)          input->hidden weight (pre-transposed)
    whh_ref:     (H, H)          hidden->hidden weight (pre-transposed)
    brnn_ref:    (1, H)          b_ih + b_hh
    wcls_ref:    (H, V)          classifier weight (pre-transposed)
    bcls_ref:    (1, V)          classifier bias
    rnn_out_ref: (S*B, H)        hidden states, time-major flattened
    pred_ref:    (S*B, 1) int32  argmax over vocab, time-major flattened
    """
    vw = emb_ref.shape[0]
    h_dim = whh_ref.shape[0]
    v_dim = wcls_ref.shape[1]
    n = seq * batch

    # ---- hoist all invariant loads (one vld each, no per-iter re-broadcast)
    emb_tbl = emb_ref[...]          # (Vw, E)
    wih = wih_ref[...]              # (E, H)
    whh = whh_ref[...]              # (H, H)
    brnn = brnn_ref[...]            # (1, H)
    wcls = wcls_ref[...]            # (H, V)
    bcls = bcls_ref[...]            # (1, V)
    ids = xcol_ref[...]             # (N, 1) int32

    # ---- embedding gather + input projection, hoisted out of the recurrence.
    # proj_tbl[v] = emb_tbl[v] @ Wih + (b_ih + b_hh); the token gather then
    # becomes a single one-hot matmul on the MXU (exact row selection).
    proj_tbl = jnp.dot(emb_tbl, wih,
                       preferred_element_type=jnp.float32) + brnn        # (Vw, H)
    onehot = (ids == jax.lax.broadcasted_iota(jnp.int32, (n, vw), 1)
              ).astype(jnp.float32)                                      # (N, Vw)
    xproj = jnp.dot(onehot, proj_tbl,
                    preferred_element_type=jnp.float32)                  # (N, H)

    # ---- serial Elman recurrence, fully unrolled (seq is static). Only the
    # (B,H)x(H,H) matmul + tanh remain on the latency-critical path. Hidden
    # states stay in registers; one contiguous store at the end.
    h = jnp.zeros((batch, h_dim), jnp.float32)
    h_steps = []
    for t in range(seq):
        x_t = xproj[t * batch:(t + 1) * batch, :]                        # (B, H)
        h = jnp.tanh(x_t + jnp.dot(h, whh,
                                   preferred_element_type=jnp.float32))  # (B, H)
        h_steps.append(h)

    h_all = jnp.concatenate(h_steps, axis=0)                             # (N, H)
    rnn_out_ref[...] = h_all      # single contiguous (S*B, H) store

    # ---- Dropout(p=0.2) is identity in eval mode. Classifier + argmax are
    # hoisted out of the loop: one dense matmul + one reduction + one store.
    logits = jnp.dot(h_all, wcls,
                     preferred_element_type=jnp.float32) + bcls          # (N, V)
    maxv = jnp.max(logits, axis=-1, keepdims=True)
    idv = jax.lax.broadcasted_iota(jnp.int32, logits.shape, 1)
    pred = jnp.min(jnp.where(logits == maxv, idv, v_dim),
                   axis=-1, keepdims=True)                               # (N, 1)
    pred_ref[...] = pred


def pmodel_forward(x, params):
    """x: (B, S) int32 token ids. Returns (argmax_pred (B,S) int32,
    rnn_out (B,S,H) float32) — same as PyTorch forward with lable=None."""
    emb_table, w_ih_t, w_hh_t, b_rnn, w_cls_t, b_cls = params
    B, S = x.shape
    H = w_hh_t.shape[0]
    N = S * B

    # trivial glue: flatten ids time-major (row = t*B + b); 64 bytes in XLA.
    xcol = jnp.transpose(x).reshape(N, 1).astype(jnp.int32)

    vmem = pl.BlockSpec(memory_space=pltpu.MemorySpace.VMEM)
    rnn_flat, pred_col = pl.pallas_call(
        functools.partial(pmodel_kernel, batch=B, seq=S),
        out_shape=(
            jax.ShapeDtypeStruct((N, H), jnp.float32),
            jax.ShapeDtypeStruct((N, 1), jnp.int32),
        ),
        in_specs=[vmem] * 7,
        out_specs=(vmem, vmem),
    )(xcol, emb_table, w_ih_t, w_hh_t, b_rnn, w_cls_t, b_cls)

    rnn_out = jnp.transpose(rnn_flat.reshape(S, B, H), (1, 0, 2))   # (B, S, H)
    pred = jnp.transpose(pred_col.reshape(S, B), (1, 0))            # (B, S)
    return pred, rnn_out


def init_params(key):
    k = jax.random.split(key, 6)
    emb_table = jax.random.normal(k[0], (WORD_SIZE, EMB_NUM), jnp.float32)
    bound = 1.0 / jnp.sqrt(HIDDEN)
    w_ih_t = jax.random.uniform(k[1], (EMB_NUM, HIDDEN), jnp.float32,
                                -bound, bound)
    w_hh_t = jax.random.uniform(k[2], (HIDDEN, HIDDEN), jnp.float32,
                                -bound, bound)
    b_rnn = jax.random.uniform(k[3], (1, HIDDEN), jnp.float32,
                               -bound, bound)          # b_ih + b_hh combined
    w_cls_t = jax.random.uniform(k[4], (HIDDEN, WORD_SIZE), jnp.float32,
                                 -bound, bound)
    b_cls = jax.random.uniform(k[5], (1, WORD_SIZE), jnp.float32,
                               -bound, bound)
    return (emb_table, w_ih_t, w_hh_t, b_rnn, w_cls_t, b_cls)


def pmodel_forward_ref(x, params):
    """Pure-JAX reference for correctness checking."""
    emb_table, w_ih_t, w_hh_t, b_rnn, w_cls_t, b_cls = params
    B, S = x.shape
    emb = jnp.take(emb_table, x, axis=0)          # (B, S, E)

    def step(h, x_t):
        h_new = jnp.tanh(x_t @ w_ih_t + h @ w_hh_t + b_rnn)
        return h_new, h_new

    h0 = jnp.zeros((B, HIDDEN), jnp.float32)
    _, outs = jax.lax.scan(step, h0, jnp.transpose(emb, (1, 0, 2)))
    rnn_out = jnp.transpose(outs, (1, 0, 2))      # (B, S, H)
    logits = rnn_out @ w_cls_t + b_cls
    return jnp.argmax(logits, axis=-1).astype(jnp.int32), rnn_out


if __name__ == "__main__":
    key = jax.random.PRNGKey(0)
    pkey, xkey = jax.random.split(key)
    params = init_params(pkey)

    B, S = 2, 8
    x = jax.random.randint(xkey, (B, S), 0, WORD_SIZE, dtype=jnp.int32)

    pred, rnn_out = jax.jit(pmodel_forward)(x, params)
    jax.block_until_ready((pred, rnn_out))

    pred_ref, rnn_out_ref = pmodel_forward_ref(x, params)
    assert pred.shape == (B, S) and rnn_out.shape == (B, S, HIDDEN)
    assert jnp.allclose(rnn_out, rnn_out_ref, atol=1e-5, rtol=1e-5)
    assert jnp.array_equal(pred, pred_ref)

    print("KERNEL_OK")
</pallas_src>

<mosaic_0001>
module attributes {stable_mosaic.version = 11 : i64} {
  func.func @pmodel_kernel(%arg0: memref<16x1xi32, #tpu.memory_space<vmem>>, %arg1: memref<32x16xf32, #tpu.memory_space<vmem>>, %arg2: memref<16x32xf32, #tpu.memory_space<vmem>>, %arg3: memref<32x32xf32, #tpu.memory_space<vmem>>, %arg4: memref<1x32xf32, #tpu.memory_space<vmem>>, %arg5: memref<32x32xf32, #tpu.memory_space<vmem>>, %arg6: memref<1x32xf32, #tpu.memory_space<vmem>>, %arg7: memref<16x32xf32, #tpu.memory_space<vmem>>, %arg8: memref<16x1xi32, #tpu.memory_space<vmem>>) attributes {dimension_semantics = [], scalar_prefetch = 0 : i64, scratch_operands = 0 : i64, tpu.core_type = #tpu.core_type<tc>} {
    %c0 = arith.constant 0 : index
    %c0_0 = arith.constant 0 : index
    %0 = vector.load %arg1[%c0, %c0_0] : memref<32x16xf32, #tpu.memory_space<vmem>>, vector<32x16xf32>
    %c0_1 = arith.constant 0 : index
    %c0_2 = arith.constant 0 : index
    %1 = vector.load %arg2[%c0_1, %c0_2] : memref<16x32xf32, #tpu.memory_space<vmem>>, vector<16x32xf32>
    %c0_3 = arith.constant 0 : index
    %c0_4 = arith.constant 0 : index
    %2 = vector.load %arg3[%c0_3, %c0_4] : memref<32x32xf32, #tpu.memory_space<vmem>>, vector<32x32xf32>
    %c0_5 = arith.constant 0 : index
    %c0_6 = arith.constant 0 : index
    %3 = vector.load %arg4[%c0_5, %c0_6] : memref<1x32xf32, #tpu.memory_space<vmem>>, vector<1x32xf32>
    %c0_7 = arith.constant 0 : index
    %c0_8 = arith.constant 0 : index
    %4 = vector.load %arg5[%c0_7, %c0_8] : memref<32x32xf32, #tpu.memory_space<vmem>>, vector<32x32xf32>
    %c0_9 = arith.constant 0 : index
    %c0_10 = arith.constant 0 : index
    %5 = vector.load %arg6[%c0_9, %c0_10] : memref<1x32xf32, #tpu.memory_space<vmem>>, vector<1x32xf32>
    %c0_11 = arith.constant 0 : index
    %c0_12 = arith.constant 0 : index
    %6 = vector.load %arg0[%c0_11, %c0_12] : memref<16x1xi32, #tpu.memory_space<vmem>>, vector<16x1xi32>
    %cst = arith.constant dense<0.000000e+00> : vector<32x32xf32>
    %7 = tpu.matmul %0, %1, %cst {dimension_numbers = #tpu.dot_dimension_numbers<[1], [0], [0], [1], [0, 0, 1, 1], [], []>} : vector<32x16xf32>, vector<16x32xf32>, vector<32x32xf32> -> vector<32x32xf32>
    %8 = vector.broadcast %3 : vector<1x32xf32> to vector<32x32xf32>
    %9 = arith.addf %7, %8 : vector<32x32xf32>
    %10 = tpu.iota {dimensions = array<i32: 1>} : vector<16x32xi32>
    %11 = vector.broadcast %6 : vector<16x1xi32> to vector<16x32xi32>
    %12 = arith.cmpi eq, %11, %10 : vector<16x32xi32>
    %13 = arith.extui %12 : vector<16x32xi1> to vector<16x32xi32>
    %14 = arith.sitofp %13 : vector<16x32xi32> to vector<16x32xf32>
    %cst_13 = arith.constant dense<0.000000e+00> : vector<16x32xf32>
    %15 = tpu.matmul %14, %9, %cst_13 {dimension_numbers = #tpu.dot_dimension_numbers<[1], [0], [0], [1], [0, 0, 1, 1], [], []>} : vector<16x32xf32>, vector<32x32xf32>, vector<16x32xf32> -> vector<16x32xf32>
    %cst_14 = arith.constant 0.000000e+00 : f32
    %16 = vector.broadcast %cst_14 : f32 to vector<2x32xf32>
    %17 = vector.extract_strided_slice %15 {offsets = [0, 0], sizes = [2, 32], strides = [1, 1]} : vector<16x32xf32> to vector<2x32xf32>
    %cst_15 = arith.constant dense<0.000000e+00> : vector<2x32xf32>
    %18 = tpu.matmul %16, %2, %cst_15 {dimension_numbers = #tpu.dot_dimension_numbers<[1], [0], [0], [1], [0, 0, 1, 1], [], []>} : vector<2x32xf32>, vector<32x32xf32>, vector<2x32xf32> -> vector<2x32xf32>
    %19 = arith.addf %17, %18 : vector<2x32xf32>
    %20 = math.tanh %19 : vector<2x32xf32>
    %21 = vector.extract_strided_slice %15 {offsets = [2, 0], sizes = [2, 32], strides = [1, 1]} : vector<16x32xf32> to vector<2x32xf32>
    %cst_16 = arith.constant dense<0.000000e+00> : vector<2x32xf32>
    %22 = tpu.matmul %20, %2, %cst_16 {dimension_numbers = #tpu.dot_dimension_numbers<[1], [0], [0], [1], [0, 0, 1, 1], [], []>} : vector<2x32xf32>, vector<32x32xf32>, vector<2x32xf32> -> vector<2x32xf32>
    %23 = arith.addf %21, %22 : vector<2x32xf32>
    %24 = math.tanh %23 : vector<2x32xf32>
    %25 = vector.extract_strided_slice %15 {offsets = [4, 0], sizes = [2, 32], strides = [1, 1]} : vector<16x32xf32> to vector<2x32xf32>
    %cst_17 = arith.constant dense<0.000000e+00> : vector<2x32xf32>
    %26 = tpu.matmul %24, %2, %cst_17 {dimension_numbers = #tpu.dot_dimension_numbers<[1], [0], [0], [1], [0, 0, 1, 1], [], []>} : vector<2x32xf32>, vector<32x32xf32>, vector<2x32xf32> -> vector<2x32xf32>
    %27 = arith.addf %25, %26 : vector<2x32xf32>
    %28 = math.tanh %27 : vector<2x32xf32>
    %29 = vector.extract_strided_slice %15 {offsets = [6, 0], sizes = [2, 32], strides = [1, 1]} : vector<16x32xf32> to vector<2x32xf32>
    %cst_18 = arith.constant dense<0.000000e+00> : vector<2x32xf32>
    %30 = tpu.matmul %28, %2, %cst_18 {dimension_numbers = #tpu.dot_dimension_numbers<[1], [0], [0], [1], [0, 0, 1, 1], [], []>} : vector<2x32xf32>, vector<32x32xf32>, vector<2x32xf32> -> vector<2x32xf32>
    %31 = arith.addf %29, %30 : vector<2x32xf32>
    %32 = math.tanh %31 : vector<2x32xf32>
    %33 = vector.extract_strided_slice %15 {offsets = [8, 0], sizes = [2, 32], strides = [1, 1]} : vector<16x32xf32> to vector<2x32xf32>
    %cst_19 = arith.constant dense<0.000000e+00> : vector<2x32xf32>
    %34 = tpu.matmul %32, %2, %cst_19 {dimension_numbers = #tpu.dot_dimension_numbers<[1], [0], [0], [1], [0, 0, 1, 1], [], []>} : vector<2x32xf32>, vector<32x32xf32>, vector<2x32xf32> -> vector<2x32xf32>
    %35 = arith.addf %33, %34 : vector<2x32xf32>
    %36 = math.tanh %35 : vector<2x32xf32>
    %37 = vector.extract_strided_slice %15 {offsets = [10, 0], sizes = [2, 32], strides = [1, 1]} : vector<16x32xf32> to vector<2x32xf32>
    %cst_20 = arith.constant dense<0.000000e+00> : vector<2x32xf32>
    %38 = tpu.matmul %36, %2, %cst_20 {dimension_numbers = #tpu.dot_dimension_numbers<[1], [0], [0], [1], [0, 0, 1, 1], [], []>} : vector<2x32xf32>, vector<32x32xf32>, vector<2x32xf32> -> vector<2x32xf32>
    %39 = arith.addf %37, %38 : vector<2x32xf32>
    %40 = math.tanh %39 : vector<2x32xf32>
    %41 = vector.extract_strided_slice %15 {offsets = [12, 0], sizes = [2, 32], strides = [1, 1]} : vector<16x32xf32> to vector<2x32xf32>
    %cst_21 = arith.constant dense<0.000000e+00> : vector<2x32xf32>
    %42 = tpu.matmul %40, %2, %cst_21 {dimension_numbers = #tpu.dot_dimension_numbers<[1], [0], [0], [1], [0, 0, 1, 1], [], []>} : vector<2x32xf32>, vector<32x32xf32>, vector<2x32xf32> -> vector<2x32xf32>
    %43 = arith.addf %41, %42 : vector<2x32xf32>
    %44 = math.tanh %43 : vector<2x32xf32>
    %45 = vector.extract_strided_slice %15 {offsets = [14, 0], sizes = [2, 32], strides = [1, 1]} : vector<16x32xf32> to vector<2x32xf32>
    %cst_22 = arith.constant dense<0.000000e+00> : vector<2x32xf32>
    %46 = tpu.matmul %44, %2, %cst_22 {dimension_numbers = #tpu.dot_dimension_numbers<[1], [0], [0], [1], [0, 0, 1, 1], [], []>} : vector<2x32xf32>, vector<32x32xf32>, vector<2x32xf32> -> vector<2x32xf32>
    %47 = arith.addf %45, %46 : vector<2x32xf32>
    %48 = math.tanh %47 : vector<2x32xf32>
    %49 = tpu.concatenate %20, %24, %28, %32, %36, %40, %44, %48 in 0 : vector<2x32xf32>, vector<2x32xf32>, vector<2x32xf32>, vector<2x32xf32>, vector<2x32xf32>, vector<2x32xf32>, vector<2x32xf32>, vector<2x32xf32> -> vector<16x32xf32>
    %c0_23 = arith.constant 0 : index
    %c0_24 = arith.constant 0 : index
    %50 = vector.load %arg7[%c0_23, %c0_24] : memref<16x32xf32, #tpu.memory_space<vmem>>, vector<16x32xf32>
    tpu.vector_store %arg7[%c0_23, %c0_24], %49 {strides = array<i32>} : memref<16x32xf32, #tpu.memory_space<vmem>>, vector<16x32xf32>,
    %cst_25 = arith.constant dense<0.000000e+00> : vector<16x32xf32>
    %51 = tpu.matmul %49, %4, %cst_25 {dimension_numbers = #tpu.dot_dimension_numbers<[1], [0], [0], [1], [0, 0, 1, 1], [], []>} : vector<16x32xf32>, vector<32x32xf32>, vector<16x32xf32> -> vector<16x32xf32>
    %52 = vector.broadcast %5 : vector<1x32xf32> to vector<16x32xf32>
    %53 = arith.addf %51, %52 : vector<16x32xf32>
    %cst_26 = arith.constant dense<0xFF800000> : vector<16xf32>
    %54 = vector.multi_reduction <maximumf>, %53, %cst_26 [1] : vector<16x32xf32> to vector<16xf32>
    %55 = vector.shape_cast %54 : vector<16xf32> to vector<16x1xf32>
    %56 = tpu.iota {dimensions = array<i32: 1>} : vector<16x32xi32>
    %57 = vector.broadcast %55 : vector<16x1xf32> to vector<16x32xf32>
    %58 = arith.cmpf oeq, %53, %57 : vector<16x32xf32>
    %c32_i32 = arith.constant 32 : i32
    %59 = vector.broadcast %c32_i32 : i32 to vector<16x32xi32>
    %60 = arith.select %58, %56, %59 : vector<16x32xi1>, vector<16x32xi32>
    %cst_27 = arith.constant dense<2147483647> : vector<16xi32>
    %61 = vector.multi_reduction <minsi>, %60, %cst_27 [1] : vector<16x32xi32> to vector<16xi32>
    %62 = vector.shape_cast %61 : vector<16xi32> to vector<16x1xi32>
    %c0_28 = arith.constant 0 : index
    %c0_29 = arith.constant 0 : index
    %63 = vector.load %arg8[%c0_28, %c0_29] : memref<16x1xi32, #tpu.memory_space<vmem>>, vector<16x1xi32>
    tpu.vector_store %arg8[%c0_28, %c0_29], %62 {strides = array<i32>} : memref<16x1xi32, #tpu.memory_space<vmem>>, vector<16x1xi32>,
    return
  }
}

</mosaic_0001>

<llo_original>
// kernel: pmodel_forward.1
$region0: #{pmodel_forward.1}
  #allocation0 [shape = 'u32[]', space=smem, size = 0x4, offset = 0x4, fixed_abs, tag = 'smem constant byte address 0x4 - core index']
  #allocation1 [shape = 'u32[144,128]{1,0:T(1,128)}', space=vmem, size = 0x12000, scoped, tag = 'internal scratch']
  %s0 = inlined_call_operand.vmem [shape: s32[16,1], index: 0, kind: input, shape index: {}]
  %s1 = inlined_call_operand.vmem [shape: f32[32,16], index: 1, kind: input, shape index: {}]
  %s2 = inlined_call_operand.hbm [shape: f32[16,32], index: 2, kind: input, shape index: {}]
  %s3 = inlined_call_operand.vmem [shape: f32[32,32], index: 3, kind: input, shape index: {}]
  %s4 = inlined_call_operand.vmem [shape: f32[1,32], index: 4, kind: input, shape index: {}]
  %s5 = inlined_call_operand.vmem [shape: f32[32,32], index: 5, kind: input, shape index: {}]
  %s6 = inlined_call_operand.vmem [shape: f32[1,32], index: 6, kind: input, shape index: {}]
  %s7 = inlined_call_operand.vmem [shape: f32[16,32], index: 7, kind: output, shape index: {0}]
  %s8 = inlined_call_operand.vmem [shape: s32[16,1], index: 8, kind: output, shape index: {1}]
  %9 = xla_tuple %s7, %s8
  %s10 = sld [smem:[#allocation0]]
  $region50: #{pmodel_forward.1} parent=0
    _
  %s12 = ssub.s32 1, %s10
  %s13 = scalar_select 0, %s12, %s10
  $region1: #{pmodel_forward.1} parent=0
    #allocation2 [shape = 'u8[8192]{0}', space=vmem, size = 0x2000, scoped, tag = 'input window, operand 2, single buffered']
    #allocation3 [shape = 's32[1]{0}', space=sflag, size = 0x4, scoped, tag = 'scoped memory for pmodel_forward.1']
    %14 = vsyncpa [#allocation3], 0
    // Predicated region
    $region2: #{pmodel_forward.1} parent=1 // pred_check
      _
    $region3: #{pmodel_forward.1} parent=1 // pred_check_branch
      %16 = sbr.rel (0) target = $region5
    $region4: #{pmodel_forward.1} parent=1 // pred_region
      _
    $region5: #{pmodel_forward.1} parent=1 // pred_fallthru
      _
    // Predicated region
    $region6: #{pmodel_forward.1} parent=1 // pred_check
      _
    $region7: #{pmodel_forward.1} parent=1 // pred_check_branch
      %18 = sbr.rel (0) target = $region9
    $region8: #{pmodel_forward.1} parent=1 // pred_region
      _
    $region9: #{pmodel_forward.1} parent=1 // pred_fallthru
      _
    // Predicated region
    $region10: #{pmodel_forward.1} parent=1 // pred_check
      _
    $region11: #{pmodel_forward.1} parent=1 // pred_check_branch
      %20 = sbr.rel (0) target = $region13
    $region12: #{pmodel_forward.1} parent=1 // pred_region
      %s22 = ssub.s32 256, 256
      %23 = vsyncadd [#allocation3], %s22
      %s24 = sshll.u32 [#allocation2], 4
      %s25 = int_to_ptr.vmem [resolvable:$true] %s24
      %30 = dma.hbm_to_vmem [thread:$0]  %s2, 256, %s25, [#allocation3], 128, 128, 8
    $region13: #{pmodel_forward.1} parent=1 // pred_fallthru
      _
    // Predicated region
    $region14: #{pmodel_forward.1} parent=1 // pred_check
      _
    $region15: #{pmodel_forward.1} parent=1 // pred_check_branch
      %32 = sbr.rel (0) target = $region17
    $region16: #{pmodel_forward.1} parent=1 // pred_region
      _
    $region17: #{pmodel_forward.1} parent=1 // pred_fallthru
      _
    // Predicated region
    $region18: #{pmodel_forward.1} parent=1 // pred_check
      _
    $region19: #{pmodel_forward.1} parent=1 // pred_check_branch
      %34 = sbr.rel (0) target = $region21
    $region20: #{pmodel_forward.1} parent=1 // pred_region
      _
    $region21: #{pmodel_forward.1} parent=1 // pred_fallthru
      _
    // Predicated region
    $region22: #{pmodel_forward.1} parent=1 // pred_check
      _
    $region23: #{pmodel_forward.1} parent=1 // pred_check_branch
      %36 = sbr.rel (0) target = $region25
    $region24: #{pmodel_forward.1} parent=1 // pred_region
      _
    $region25: #{pmodel_forward.1} parent=1 // pred_fallthru
      _
    // Predicated region
    $region26: #{pmodel_forward.1} parent=1 // pred_check
      _
    $region27: #{pmodel_forward.1} parent=1 // pred_check_branch
      %38 = sbr.rel (0) target = $region29
    $region28: #{pmodel_forward.1} parent=1 // pred_region
      _
    $region29: #{pmodel_forward.1} parent=1 // pred_fallthru
      _
    // Predicated region
    $region30: #{pmodel_forward.1} parent=1 // pred_check
      _
    $region31: #{pmodel_forward.1} parent=1 // pred_check_branch
      %40 = sbr.rel (0) target = $region33
    $region32: #{pmodel_forward.1} parent=1 // pred_region
      %41 = dma.done [#allocation3], 256
    $region33: #{pmodel_forward.1} parent=1 // pred_fallthru
      _
    %v42 = vld [vmem:[%s1] sm:$0xff]
    %v43 = vld [vmem:[%s1 + $0x8] sm:$0xff]
    %v44 = vld [vmem:[%s1 + $0x10] sm:$0xff]
    %v45 = vld [vmem:[%s1 + $0x18] sm:$0xff]
    %v46 = vld [vmem:[#allocation2] sm:$0xff]
    %v47 = vld [vmem:[#allocation2 + $0x8] sm:$0xff]
    %v48 = vld [vmem:[%s3] sm:$0xff]
    %v49 = vld [vmem:[%s3 + $0x8] sm:$0xff]
    %v50 = vld [vmem:[%s3 + $0x10] sm:$0xff]
    %v51 = vld [vmem:[%s3 + $0x18] sm:$0xff]
    %v52 = vld [vmem:[%s4] sm:$0x1]
    %v53 = vld [vmem:[%s5] sm:$0xff]
    %v54 = vld [vmem:[%s5 + $0x8] sm:$0xff]
    %v55 = vld [vmem:[%s5 + $0x10] sm:$0xff]
    %v56 = vld [vmem:[%s5 + $0x18] sm:$0xff]
    %v57 = vld [vmem:[%s6] sm:$0x1]
    %v58 = vld [vmem:[%s0] sm:$0xff]
    %v59 = vld [vmem:[%s0 + $0x8] sm:$0xff]
    %v61 = vlaneseq
    %v62 = vshrl.u32 %v61, 7
    %v63 = vsub.s32 0, %v62
    %v64 = vrot.slane %v52, %v63
    %vm66 = vcmask 130048
    %v68 = vsel %vm66, %v42, 0
    %v71 = vsel %vm66, %v43, 0
    %v74 = vsel %vm66, %v44, 0
    %v77 = vsel %vm66, %v45, 0
    %79 = vmatprep.subr.mxu0 0.0
    %80 = vmatpush1.msra.mxu0 %v46
    %81 = vmatprep.subr.mxu0 0.0
    %82 = vmatpush1.msra.mxu0 %v47
    %83 = vmatprep.subr.mxu0 0.0
    %84 = vmatpush1.msra.mxu0 0.0
    %85 = vmatprep.subr.mxu0 0.0
    %86 = vmatpush1.msra.mxu0 0.0
    %87 = vmatprep.subr.mxu0 0.0
    %88 = vmatpush1.msra.mxu0 0.0
    %89 = vmatprep.subr.mxu0 0.0
    %90 = vmatpush1.msra.mxu0 0.0
    %91 = vmatprep.subr.mxu0 0.0
    %92 = vmatpush1.msra.mxu0 0.0
    %93 = vmatprep.subr.mxu0 0.0
    %94 = vmatpush1.msra.mxu0 0.0
    %95 = vmatprep.subr.mxu0 0.0
    %96 = vmatpush1.msra.mxu0 0.0
    %97 = vmatprep.subr.mxu0 0.0
    %98 = vmatpush1.msra.mxu0 0.0
    %99 = vmatprep.subr.mxu0 0.0
    %100 = vmatpush1.msra.mxu0 0.0
    %101 = vmatprep.subr.mxu0 0.0
    %102 = vmatpush1.msra.mxu0 0.0
    %103 = vmatprep.subr.mxu0 0.0
    %104 = vmatpush1.msra.mxu0 0.0
    %105 = vmatprep.subr.mxu0 0.0
    %106 = vmatpush1.msra.mxu0 0.0
    %107 = vmatprep.subr.mxu0 0.0
    %108 = vmatpush1.msra.mxu0 0.0
    %109 = vmatprep.subr.mxu0 0.0
    %110 = vmatpush1.msra.mxu0 0.0
    %111 = vmatprep.subr.mxu0 0.0
    %112 = vmatpush1.msra.mxu0 0.0
    %113 = vmatprep.subr.mxu0 0.0
    %114 = vmatpush1.msra.mxu0 0.0
    %115 = vmatprep.subr.mxu0 0.0
    %116 = vmatpush1.msra.mxu0 0.0
    %117 = vmatprep.subr.mxu0 0.0
    %118 = vmatpush1.msra.mxu0 0.0
    %119 = vmatprep.subr.mxu0 0.0
    %120 = vmatpush1.msra.mxu0 0.0
    %121 = vmatprep.subr.mxu0 0.0
    %122 = vmatpush1.msra.mxu0 0.0
    %123 = vmatprep.subr.mxu0 0.0
    %124 = vmatpush1.msra.mxu0 0.0
    %125 = vmatprep.subr.mxu0 0.0
    %126 = vmatpush1.msra.mxu0 0.0
    %127 = vmatprep.subr.mxu0 0.0
    %128 = vmatpush1.msra.mxu0 0.0
    %129 = vmatprep.subr.mxu0 0.0
    %130 = vmatpush1.msra.mxu0 0.0
    %131 = vmatprep.subr.mxu0 0.0
    %132 = vmatpush1.msra.mxu0 0.0
    %133 = vmatprep.subr.mxu0 0.0
    %134 = vmatpush1.msra.mxu0 0.0
    %135 = vmatprep.subr.mxu0 0.0
    %136 = vmatpush1.msra.mxu0 0.0
    %137 = vmatprep.subr.mxu0 0.0
    %138 = vmatpush1.msra.mxu0 0.0
    %139 = vmatprep.subr.mxu0 0.0
    %140 = vmatpush1.msra.mxu0 0.0
    %141 = vmatprep.subr.mxu0 0.0
    %142 = vmatpush1.msra.mxu0 0.0
    %143 = vmatprep.mubr.f32.mxu0 0.0
    %144 = vmatmul.mubr.f32.gmra.mrb[0].mxu0 %v68
    %v145 = vpop.f32.mrb[0].mxu0
    %v146 = vadd.f32 %v64, %v145
    %v147 = vpop.f32.mrb[0].mxu0
    %148 = vmatprep.mubr.f32.mxu0 0.0
    %149 = vmatmul.mubr.f32.gmra.mrb[0].mxu0 %v71
    %v150 = vpop.f32.mrb[0].mxu0
    %v151 = vadd.f32 %v64, %v150
    %v152 = vpop.f32.mrb[0].mxu0
    %153 = vmatprep.mubr.f32.mxu0 0.0
    %154 = vmatmul.mubr.f32.gmra.mrb[0].mxu0 %v74
    %v155 = vpop.f32.mrb[0].mxu0
    %v156 = vadd.f32 %v64, %v155
    %v157 = vpop.f32.mrb[0].mxu0
    %158 = vmatprep.mubr.f32.mxu0 0.0
    %159 = vmatmul.mubr.f32.gmra.mrb[0].mxu0 %v77
    %v160 = vpop.f32.mrb[0].mxu0
    %v161 = vadd.f32 %v64, %v160
    %v162 = vpop.f32.mrb[0].mxu0
    %163 = vdwg.mxu0
    %v164 = vlaneseq
    %v165 = vand.u32 %v164, 127
    %166 = vset.pattern.permute.xlu0 0
    %167 = vperm.xlu0 %166, %v58
    %v168 = vpop.permute.xlu0 %167
    %169 = vset.pattern.permute.xlu0 0
    %170 = vperm.xlu0 %169, %v59
    %v171 = vpop.permute.xlu0 %170
    %vm172 = vcmp.eq.s32.totalorder %v168, %v165
    %vm173 = vcmp.eq.s32.totalorder %v171, %v165
    %v174 = vsel %vm172, 1, 0
    %v175 = vsel %vm173, 1, 0
    %v176 = vcvt.s32.f32 %v174
    %v177 = vcvt.s32.f32 %v175
    %vm178 = vcmask 261120
    %v180 = vsel %vm178, %v176, 0
    %v183 = vsel %vm178, %v177, 0
    %185 = vmatprep.subr.mxu0 0.0
    %186 = vmatpush1.msra.mxu0 %v146
    %187 = vmatprep.subr.mxu0 0.0
    %188 = vmatpush1.msra.mxu0 %v151
    %189 = vmatprep.subr.mxu0 0.0
    %190 = vmatpush1.msra.mxu0 %v156
    %191 = vmatprep.subr.mxu0 0.0
    %192 = vmatpush1.msra.mxu0 %v161
    %193 = vmatprep.subr.mxu0 0.0
    %194 = vmatpush1.msra.mxu0 0.0
    %195 = vmatprep.subr.mxu0 0.0
    %196 = vmatpush1.msra.mxu0 0.0
    %197 = vmatprep.subr.mxu0 0.0
    %198 = vmatpush1.msra.mxu0 0.0
    %199 = vmatprep.subr.mxu0 0.0
    %200 = vmatpush1.msra.mxu0 0.0
    %201 = vmatprep.subr.mxu0 0.0
    %202 = vmatpush1.msra.mxu0 0.0
    %203 = vmatprep.subr.mxu0 0.0
    %204 = vmatpush1.msra.mxu0 0.0
    %205 = vmatprep.subr.mxu0 0.0
    %206 = vmatpush1.msra.mxu0 0.0
    %207 = vmatprep.subr.mxu0 0.0
    %208 = vmatpush1.msra.mxu0 0.0
    %209 = vmatprep.subr.mxu0 0.0
    %210 = vmatpush1.msra.mxu0 0.0
    %211 = vmatprep.subr.mxu0 0.0
    %212 = vmatpush1.msra.mxu0 0.0
    %213 = vmatprep.subr.mxu0 0.0
    %214 = vmatpush1.msra.mxu0 0.0
    %215 = vmatprep.subr.mxu0 0.0
    %216 = vmatpush1.msra.mxu0 0.0
    %217 = vmatprep.subr.mxu0 0.0
    %218 = vmatpush1.msra.mxu0 0.0
    %219 = vmatprep.subr.mxu0 0.0
    %220 = vmatpush1.msra.mxu0 0.0
    %221 = vmatprep.subr.mxu0 0.0
    %222 = vmatpush1.msra.mxu0 0.0
    %223 = vmatprep.subr.mxu0 0.0
    %224 = vmatpush1.msra.mxu0 0.0
    %225 = vmatprep.subr.mxu0 0.0
    %226 = vmatpush1.msra.mxu0 0.0
    %227 = vmatprep.subr.mxu0 0.0
    %228 = vmatpush1.msra.mxu0 0.0
    %229 = vmatprep.subr.mxu0 0.0
    %230 = vmatpush1.msra.mxu0 0.0
    %231 = vmatprep.subr.mxu0 0.0
    %232 = vmatpush1.msra.mxu0 0.0
    %233 = vmatprep.subr.mxu0 0.0
    %234 = vmatpush1.msra.mxu0 0.0
    %235 = vmatprep.subr.mxu0 0.0
    %236 = vmatpush1.msra.mxu0 0.0
    %237 = vmatprep.subr.mxu0 0.0
    %238 = vmatpush1.msra.mxu0 0.0
    %239 = vmatprep.subr.mxu0 0.0
    %240 = vmatpush1.msra.mxu0 0.0
    %241 = vmatprep.subr.mxu0 0.0
    %242 = vmatpush1.msra.mxu0 0.0
    %243 = vmatprep.subr.mxu0 0.0
    %244 = vmatpush1.msra.mxu0 0.0
    %245 = vmatprep.subr.mxu0 0.0
    %246 = vmatpush1.msra.mxu0 0.0
    %247 = vmatprep.subr.mxu0 0.0
    %248 = vmatpush1.msra.mxu0 0.0
    %249 = vmatprep.mubr.f32.mxu0 0.0
    %250 = vmatmul.mubr.f32.gmra.mrb[0].mxu0 %v180
    %v251 = vpop.f32.mrb[0].mxu0
    %v252 = vadd.f32 0.0, %v251
    %v253 = vpop.f32.mrb[0].mxu0
    %254 = vmatprep.mubr.f32.mxu0 0.0
    %255 = vmatmul.mubr.f32.gmra.mrb[0].mxu0 %v183
    %v256 = vpop.f32.mrb[0].mxu0
    %v257 = vadd.f32 0.0, %v256
    %v258 = vpop.f32.mrb[0].mxu0
    %259 = vdwg.mxu0
    %v261 = vsel %vm178, 0.0, 0
    %263 = vmatprep.subr.mxu0 0.0
    %264 = vmatpush1.msra.mxu0 %v48
    %265 = vmatprep.subr.mxu0 0.0
    %266 = vmatpush1.msra.mxu0 %v49
    %267 = vmatprep.subr.mxu0 0.0
    %268 = vmatpush1.msra.mxu0 %v50
    %269 = vmatprep.subr.mxu0 0.0
    %270 = vmatpush1.msra.mxu0 %v51
    %271 = vmatprep.subr.mxu0 0.0
    %272 = vmatpush1.msra.mxu0 0.0
    %273 = vmatprep.subr.mxu0 0.0
    %274 = vmatpush1.msra.mxu0 0.0
    %275 = vmatprep.subr.mxu0 0.0
    %276 = vmatpush1.msra.mxu0 0.0
    %277 = vmatprep.subr.mxu0 0.0
    %278 = vmatpush1.msra.mxu0 0.0
    %279 = vmatprep.subr.mxu0 0.0
    %280 = vmatpush1.msra.mxu0 0.0
    %281 = vmatprep.subr.mxu0 0.0
    %282 = vmatpush1.msra.mxu0 0.0
    %283 = vmatprep.subr.mxu0 0.0
    %284 = vmatpush1.msra.mxu0 0.0
    %285 = vmatprep.subr.mxu0 0.0
    %286 = vmatpush1.msra.mxu0 0.0
    %287 = vmatprep.subr.mxu0 0.0
    %288 = vmatpush1.msra.mxu0 0.0
    %289 = vmatprep.subr.mxu0 0.0
    %290 = vmatpush1.msra.mxu0 0.0
    %291 = vmatprep.subr.mxu0 0.0
    %292 = vmatpush1.msra.mxu0 0.0
    %293 = vmatprep.subr.mxu0 0.0
    %294 = vmatpush1.msra.mxu0 0.0
    %295 = vmatprep.subr.mxu0 0.0
    %296 = vmatpush1.msra.mxu0 0.0
    %297 = vmatprep.subr.mxu0 0.0
    %298 = vmatpush1.msra.mxu0 0.0
    %299 = vmatprep.subr.mxu0 0.0
    %300 = vmatpush1.msra.mxu0 0.0
    %301 = vmatprep.subr.mxu0 0.0
    %302 = vmatpush1.msra.mxu0 0.0
    %303 = vmatprep.subr.mxu0 0.0
    %304 = vmatpush1.msra.mxu0 0.0
    %305 = vmatprep.subr.mxu0 0.0
    %306 = vmatpush1.msra.mxu0 0.0
    %307 = vmatprep.subr.mxu0 0.0
    %308 = vmatpush1.msra.mxu0 0.0
    %309 = vmatprep.subr.mxu0 0.0
    %310 = vmatpush1.msra.mxu0 0.0
    %311 = vmatprep.subr.mxu0 0.0
    %312 = vmatpush1.msra.mxu0 0.0
    %313 = vmatprep.subr.mxu0 0.0
    %314 = vmatpush1.msra.mxu0 0.0
    %315 = vmatprep.subr.mxu0 0.0
    %316 = vmatpush1.msra.mxu0 0.0
    %317 = vmatprep.subr.mxu0 0.0
    %318 = vmatpush1.msra.mxu0 0.0
    %319 = vmatprep.subr.mxu0 0.0
    %320 = vmatpush1.msra.mxu0 0.0
    %321 = vmatprep.subr.mxu0 0.0
    %322 = vmatpush1.msra.mxu0 0.0
    %323 = vmatprep.subr.mxu0 0.0
    %324 = vmatpush1.msra.mxu0 0.0
    %325 = vmatprep.subr.mxu0 0.0
    %326 = vmatpush1.msra.mxu0 0.0
    %327 = vmatprep.mubr.f32.mxu0 0.0
    %328 = vmatmul.mubr.f32.gmra.mrb[0].mxu0 %v261
    %v329 = vpop.f32.mrb[0].mxu0
    %v330 = vadd.f32 0.0, %v329
    %v331 = vpop.f32.mrb[0].mxu0
    %332 = vdwg.mxu0
    %v333 = vadd.f32 %v252, %v330
    %v334 = vtanh.pop %v333
    %v336 = vsel %vm178, %v334, 0
    %338 = vmatprep.subr.mxu0 0.0
    %339 = vmatpush1.msra.mxu0 %v48
    %340 = vmatprep.subr.mxu0 0.0
    %341 = vmatpush1.msra.mxu0 %v49
    %342 = vmatprep.subr.mxu0 0.0
    %343 = vmatpush1.msra.mxu0 %v50
    %344 = vmatprep.subr.mxu0 0.0
    %345 = vmatpush1.msra.mxu0 %v51
    %346 = vmatprep.subr.mxu0 0.0
    %347 = vmatpush1.msra.mxu0 0.0
    %348 = vmatprep.subr.mxu0 0.0
    %349 = vmatpush1.msra.mxu0 0.0
    %350 = vmatprep.subr.mxu0 0.0
    %351 = vmatpush1.msra.mxu0 0.0
    %352 = vmatprep.subr.mxu0 0.0
    %353 = vmatpush1.msra.mxu0 0.0
    %354 = vmatprep.subr.mxu0 0.0
    %355 = vmatpush1.msra.mxu0 0.0
    %356 = vmatprep.subr.mxu0 0.0
    %357 = vmatpush1.msra.mxu0 0.0
    %358 = vmatprep.subr.mxu0 0.0
    %359 = vmatpush1.msra.mxu0 0.0
    %360 = vmatprep.subr.mxu0 0.0
    %361 = vmatpush1.msra.mxu0 0.0
    %362 = vmatprep.subr.mxu0 0.0
    %363 = vmatpush1.msra.mxu0 0.0
    %364 = vmatprep.subr.mxu0 0.0
    %365 = vmatpush1.msra.mxu0 0.0
    %366 = vmatprep.subr.mxu0 0.0
    %367 = vmatpush1.msra.mxu0 0.0
    %368 = vmatprep.subr.mxu0 0.0
    %369 = vmatpush1.msra.mxu0 0.0
    %370 = vmatprep.subr.mxu0 0.0
    %371 = vmatpush1.msra.mxu0 0.0
    %372 = vmatprep.subr.mxu0 0.0
    %373 = vmatpush1.msra.mxu0 0.0
    %374 = vmatprep.subr.mxu0 0.0
    %375 = vmatpush1.msra.mxu0 0.0
    %376 = vmatprep.subr.mxu0 0.0
    %377 = vmatpush1.msra.mxu0 0.0
    %378 = vmatprep.subr.mxu0 0.0
    %379 = vmatpush1.msra.mxu0 0.0
    %380 = vmatprep.subr.mxu0 0.0
    %381 = vmatpush1.msra.mxu0 0.0
    %382 = vmatprep.subr.mxu0 0.0
    %383 = vmatpush1.msra.mxu0 0.0
    %384 = vmatprep.subr.mxu0 0.0
    %385 = vmatpush1.msra.mxu0 0.0
    %386 = vmatprep.subr.mxu0 0.0
    %387 = vmatpush1.msra.mxu0 0.0
    %388 = vmatprep.subr.mxu0 0.0
    %389 = vmatpush1.msra.mxu0 0.0
    %390 = vmatprep.subr.mxu0 0.0
    %391 = vmatpush1.msra.mxu0 0.0
    %392 = vmatprep.subr.mxu0 0.0
    %393 = vmatpush1.msra.mxu0 0.0
    %394 = vmatprep.subr.mxu0 0.0
    %395 = vmatpush1.msra.mxu0 0.0
    %396 = vmatprep.subr.mxu0 0.0
    %397 = vmatpush1.msra.mxu0 0.0
    %398 = vmatprep.subr.mxu0 0.0
    %399 = vmatpush1.msra.mxu0 0.0
    %400 = vmatprep.subr.mxu0 0.0
    %401 = vmatpush1.msra.mxu0 0.0
    %402 = vmatprep.mubr.f32.mxu0 0.0
    %403 = vmatmul.mubr.f32.gmra.mrb[0].mxu0 %v336
    %v404 = vpop.f32.mrb[0].mxu0
    %v405 = vadd.f32 0.0, %v404
    %v406 = vpop.f32.mrb[0].mxu0
    %407 = vdwg.mxu0
    %v409 = vrot.slane %v405, 6
    %v411 = vadd.f32 %v252, %v409
    %v412 = vtanh.pop %v411
    %v414 = vrot.slane %v412, 2
    %v415 = vsel %vm178, %v414, 0
    %417 = vmatprep.subr.mxu0 0.0
    %418 = vmatpush1.msra.mxu0 %v48
    %419 = vmatprep.subr.mxu0 0.0
    %420 = vmatpush1.msra.mxu0 %v49
    %421 = vmatprep.subr.mxu0 0.0
    %422 = vmatpush1.msra.mxu0 %v50
    %423 = vmatprep.subr.mxu0 0.0
    %424 = vmatpush1.msra.mxu0 %v51
    %425 = vmatprep.subr.mxu0 0.0
    %426 = vmatpush1.msra.mxu0 0.0
    %427 = vmatprep.subr.mxu0 0.0
    %428 = vmatpush1.msra.mxu0 0.0
    %429 = vmatprep.subr.mxu0 0.0
    %430 = vmatpush1.msra.mxu0 0.0
    %431 = vmatprep.subr.mxu0 0.0
    %432 = vmatpush1.msra.mxu0 0.0
    %433 = vmatprep.subr.mxu0 0.0
    %434 = vmatpush1.msra.mxu0 0.0
    %435 = vmatprep.subr.mxu0 0.0
    %436 = vmatpush1.msra.mxu0 0.0
    %437 = vmatprep.subr.mxu0 0.0
    %438 = vmatpush1.msra.mxu0 0.0
    %439 = vmatprep.subr.mxu0 0.0
    %440 = vmatpush1.msra.mxu0 0.0
    %441 = vmatprep.subr.mxu0 0.0
    %442 = vmatpush1.msra.mxu0 0.0
    %443 = vmatprep.subr.mxu0 0.0
    %444 = vmatpush1.msra.mxu0 0.0
    %445 = vmatprep.subr.mxu0 0.0
    %446 = vmatpush1.msra.mxu0 0.0
    %447 = vmatprep.subr.mxu0 0.0
    %448 = vmatpush1.msra.mxu0 0.0
    %449 = vmatprep.subr.mxu0 0.0
    %450 = vmatpush1.msra.mxu0 0.0
    %451 = vmatprep.subr.mxu0 0.0
    %452 = vmatpush1.msra.mxu0 0.0
    %453 = vmatprep.subr.mxu0 0.0
    %454 = vmatpush1.msra.mxu0 0.0
    %455 = vmatprep.subr.mxu0 0.0
    %456 = vmatpush1.msra.mxu0 0.0
    %457 = vmatprep.subr.mxu0 0.0
    %458 = vmatpush1.msra.mxu0 0.0
    %459 = vmatprep.subr.mxu0 0.0
    %460 = vmatpush1.msra.mxu0 0.0
    %461 = vmatprep.subr.mxu0 0.0
    %462 = vmatpush1.msra.mxu0 0.0
    %463 = vmatprep.subr.mxu0 0.0
    %464 = vmatpush1.msra.mxu0 0.0
    %465 = vmatprep.subr.mxu0 0.0
    %466 = vmatpush1.msra.mxu0 0.0
    %467 = vmatprep.subr.mxu0 0.0
    %468 = vmatpush1.msra.mxu0 0.0
    %469 = vmatprep.subr.mxu0 0.0
    %470 = vmatpush1.msra.mxu0 0.0
    %471 = vmatprep.subr.mxu0 0.0
    %472 = vmatpush1.msra.mxu0 0.0
    %473 = vmatprep.subr.mxu0 0.0
    %474 = vmatpush1.msra.mxu0 0.0
    %475 = vmatprep.subr.mxu0 0.0
    %476 = vmatpush1.msra.mxu0 0.0
    %477 = vmatprep.subr.mxu0 0.0
    %478 = vmatpush1.msra.mxu0 0.0
    %479 = vmatprep.subr.mxu0 0.0
    %480 = vmatpush1.msra.mxu0 0.0
    %481 = vmatprep.mubr.f32.mxu0 0.0
    %482 = vmatmul.mubr.f32.gmra.mrb[0].mxu0 %v415
    %v483 = vpop.f32.mrb[0].mxu0
    %v484 = vadd.f32 0.0, %v483
    %v485 = vpop.f32.mrb[0].mxu0
    %486 = vdwg.mxu0
    %v488 = vrot.slane %v484, 4
    %v490 = vadd.f32 %v252, %v488
    %v491 = vtanh.pop %v490
    %v493 = vrot.slane %v491, 4
    %v494 = vsel %vm178, %v493, 0
    %496 = vmatprep.subr.mxu0 0.0
    %497 = vmatpush1.msra.mxu0 %v48
    %498 = vmatprep.subr.mxu0 0.0
    %499 = vmatpush1.msra.mxu0 %v49
    %500 = vmatprep.subr.mxu0 0.0
    %501 = vmatpush1.msra.mxu0 %v50
    %502 = vmatprep.subr.mxu0 0.0
    %503 = vmatpush1.msra.mxu0 %v51
    %504 = vmatprep.subr.mxu0 0.0
    %505 = vmatpush1.msra.mxu0 0.0
    %506 = vmatprep.subr.mxu0 0.0
    %507 = vmatpush1.msra.mxu0 0.0
    %508 = vmatprep.subr.mxu0 0.0
    %509 = vmatpush1.msra.mxu0 0.0
    %510 = vmatprep.subr.mxu0 0.0
    %511 = vmatpush1.msra.mxu0 0.0
    %512 = vmatprep.subr.mxu0 0.0
    %513 = vmatpush1.msra.mxu0 0.0
    %514 = vmatprep.subr.mxu0 0.0
    %515 = vmatpush1.msra.mxu0 0.0
    %516 = vmatprep.subr.mxu0 0.0
    %517 = vmatpush1.msra.mxu0 0.0
    %518 = vmatprep.subr.mxu0 0.0
    %519 = vmatpush1.msra.mxu0 0.0
    %520 = vmatprep.subr.mxu0 0.0
    %521 = vmatpush1.msra.mxu0 0.0
    %522 = vmatprep.subr.mxu0 0.0
    %523 = vmatpush1.msra.mxu0 0.0
    %524 = vmatprep.subr.mxu0 0.0
    %525 = vmatpush1.msra.mxu0 0.0
    %526 = vmatprep.subr.mxu0 0.0
    %527 = vmatpush1.msra.mxu0 0.0
    %528 = vmatprep.subr.mxu0 0.0
    %529 = vmatpush1.msra.mxu0 0.0
    %530 = vmatprep.subr.mxu0 0.0
    %531 = vmatpush1.msra.mxu0 0.0
    %532 = vmatprep.subr.mxu0 0.0
    %533 = vmatpush1.msra.mxu0 0.0
    %534 = vmatprep.subr.mxu0 0.0
    %535 = vmatpush1.msra.mxu0 0.0
    %536 = vmatprep.subr.mxu0 0.0
    %537 = vmatpush1.msra.mxu0 0.0
    %538 = vmatprep.subr.mxu0 0.0
    %539 = vmatpush1.msra.mxu0 0.0
    %540 = vmatprep.subr.mxu0 0.0
    %541 = vmatpush1.msra.mxu0 0.0
    %542 = vmatprep.subr.mxu0 0.0
    %543 = vmatpush1.msra.mxu0 0.0
    %544 = vmatprep.subr.mxu0 0.0
    %545 = vmatpush1.msra.mxu0 0.0
    %546 = vmatprep.subr.mxu0 0.0
    %547 = vmatpush1.msra.mxu0 0.0
    %548 = vmatprep.subr.mxu0 0.0
    %549 = vmatpush1.msra.mxu0 0.0
    %550 = vmatprep.subr.mxu0 0.0
    %551 = vmatpush1.msra.mxu0 0.0
    %552 = vmatprep.subr.mxu0 0.0
    %553 = vmatpush1.msra.mxu0 0.0
    %554 = vmatprep.subr.mxu0 0.0
    %555 = vmatpush1.msra.mxu0 0.0
    %556 = vmatprep.subr.mxu0 0.0
    %557 = vmatpush1.msra.mxu0 0.0
    %558 = vmatprep.subr.mxu0 0.0
    %559 = vmatpush1.msra.mxu0 0.0
    %560 = vmatprep.mubr.f32.mxu0 0.0
    %561 = vmatmul.mubr.f32.gmra.mrb[0].mxu0 %v494
    %v562 = vpop.f32.mrb[0].mxu0
    %v563 = vadd.f32 0.0, %v562
    %v564 = vpop.f32.mrb[0].mxu0
    %565 = vdwg.mxu0
    %v567 = vrot.slane %v563, 2
    %v569 = vadd.f32 %v252, %v567
    %v570 = vtanh.pop %v569
    %v572 = vrot.slane %v570, 6
    %v573 = vsel %vm178, %v572, 0
    %575 = vmatprep.subr.mxu0 0.0
    %576 = vmatpush1.msra.mxu0 %v48
    %577 = vmatprep.subr.mxu0 0.0
    %578 = vmatpush1.msra.mxu0 %v49
    %579 = vmatprep.subr.mxu0 0.0
    %580 = vmatpush1.msra.mxu0 %v50
    %581 = vmatprep.subr.mxu0 0.0
    %582 = vmatpush1.msra.mxu0 %v51
    %583 = vmatprep.subr.mxu0 0.0
    %584 = vmatpush1.msra.mxu0 0.0
    %585 = vmatprep.subr.mxu0 0.0
    %586 = vmatpush1.msra.mxu0 0.0
    %587 = vmatprep.subr.mxu0 0.0
    %588 = vmatpush1.msra.mxu0 0.0
    %589 = vmatprep.subr.mxu0 0.0
    %590 = vmatpush1.msra.mxu0 0.0
    %591 = vmatprep.subr.mxu0 0.0
    %592 = vmatpush1.msra.mxu0 0.0
    %593 = vmatprep.subr.mxu0 0.0
    %594 = vmatpush1.msra.mxu0 0.0
    %595 = vmatprep.subr.mxu0 0.0
    %596 = vmatpush1.msra.mxu0 0.0
    %597 = vmatprep.subr.mxu0 0.0
    %598 = vmatpush1.msra.mxu0 0.0
    %599 = vmatprep.subr.mxu0 0.0
    %600 = vmatpush1.msra.mxu0 0.0
    %601 = vmatprep.subr.mxu0 0.0
    %602 = vmatpush1.msra.mxu0 0.0
    %603 = vmatprep.subr.mxu0 0.0
    %604 = vmatpush1.msra.mxu0 0.0
    %605 = vmatprep.subr.mxu0 0.0
    %606 = vmatpush1.msra.mxu0 0.0
    %607 = vmatprep.subr.mxu0 0.0
    %608 = vmatpush1.msra.mxu0 0.0
    %609 = vmatprep.subr.mxu0 0.0
    %610 = vmatpush1.msra.mxu0 0.0
    %611 = vmatprep.subr.mxu0 0.0
    %612 = vmatpush1.msra.mxu0 0.0
    %613 = vmatprep.subr.mxu0 0.0
    %614 = vmatpush1.msra.mxu0 0.0
    %615 = vmatprep.subr.mxu0 0.0
    %616 = vmatpush1.msra.mxu0 0.0
    %617 = vmatprep.subr.mxu0 0.0
    %618 = vmatpush1.msra.mxu0 0.0
    %619 = vmatprep.subr.mxu0 0.0
    %620 = vmatpush1.msra.mxu0 0.0
    %621 = vmatprep.subr.mxu0 0.0
    %622 = vmatpush1.msra.mxu0 0.0
    %623 = vmatprep.subr.mxu0 0.0
    %624 = vmatpush1.msra.mxu0 0.0
    %625 = vmatprep.subr.mxu0 0.0
    %626 = vmatpush1.msra.mxu0 0.0
    %627 = vmatprep.subr.mxu0 0.0
    %628 = vmatpush1.msra.mxu0 0.0
    %629 = vmatprep.subr.mxu0 0.0
    %630 = vmatpush1.msra.mxu0 0.0
    %631 = vmatprep.subr.mxu0 0.0
    %632 = vmatpush1.msra.mxu0 0.0
    %633 = vmatprep.subr.mxu0 0.0
    %634 = vmatpush1.msra.mxu0 0.0
    %635 = vmatprep.subr.mxu0 0.0
    %636 = vmatpush1.msra.mxu0 0.0
    %637 = vmatprep.subr.mxu0 0.0
    %638 = vmatpush1.msra.mxu0 0.0
    %639 = vmatprep.mubr.f32.mxu0 0.0
    %640 = vmatmul.mubr.f32.gmra.mrb[0].mxu0 %v573
    %v641 = vpop.f32.mrb[0].mxu0
    %v642 = vadd.f32 0.0, %v641
    %v643 = vpop.f32.mrb[0].mxu0
    %644 = vdwg.mxu0
    %v645 = vadd.f32 %v257, %v642
    %v646 = vtanh.pop %v645
    %v648 = vsel %vm178, %v646, 0
    %650 = vmatprep.subr.mxu0 0.0
    %651 = vmatpush1.msra.mxu0 %v48
    %652 = vmatprep.subr.mxu0 0.0
    %653 = vmatpush1.msra.mxu0 %v49
    %654 = vmatprep.subr.mxu0 0.0
    %655 = vmatpush1.msra.mxu0 %v50
    %656 = vmatprep.subr.mxu0 0.0
    %657 = vmatpush1.msra.mxu0 %v51
    %658 = vmatprep.subr.mxu0 0.0
    %659 = vmatpush1.msra.mxu0 0.0
    %660 = vmatprep.subr.mxu0 0.0
    %661 = vmatpush1.msra.mxu0 0.0
    %662 = vmatprep.subr.mxu0 0.0
    %663 = vmatpush1.msra.mxu0 0.0
    %664 = vmatprep.subr.mxu0 0.0
    %665 = vmatpush1.msra.mxu0 0.0
    %666 = vmatprep.subr.mxu0 0.0
    %667 = vmatpush1.msra.mxu0 0.0
    %668 = vmatprep.subr.mxu0 0.0
    %669 = vmatpush1.msra.mxu0 0.0
    %670 = vmatprep.subr.mxu0 0.0
    %671 = vmatpush1.msra.mxu0 0.0
    %672 = vmatprep.subr.mxu0 0.0
    %673 = vmatpush1.msra.mxu0 0.0
    %674 = vmatprep.subr.mxu0 0.0
    %675 = vmatpush1.msra.mxu0 0.0
    %676 = vmatprep.subr.mxu0 0.0
    %677 = vmatpush1.msra.mxu0 0.0
    %678 = vmatprep.subr.mxu0 0.0
    %679 = vmatpush1.msra.mxu0 0.0
    %680 = vmatprep.subr.mxu0 0.0
    %681 = vmatpush1.msra.mxu0 0.0
    %682 = vmatprep.subr.mxu0 0.0
    %683 = vmatpush1.msra.mxu0 0.0
    %684 = vmatprep.subr.mxu0 0.0
    %685 = vmatpush1.msra.mxu0 0.0
    %686 = vmatprep.subr.mxu0 0.0
    %687 = vmatpush1.msra.mxu0 0.0
    %688 = vmatprep.subr.mxu0 0.0
    %689 = vmatpush1.msra.mxu0 0.0
    %690 = vmatprep.subr.mxu0 0.0
    %691 = vmatpush1.msra.mxu0 0.0
    %692 = vmatprep.subr.mxu0 0.0
    %693 = vmatpush1.msra.mxu0 0.0
    %694 = vmatprep.subr.mxu0 0.0
    %695 = vmatpush1.msra.mxu0 0.0
    %696 = vmatprep.subr.mxu0 0.0
    %697 = vmatpush1.msra.mxu0 0.0
    %698 = vmatprep.subr.mxu0 0.0
    %699 = vmatpush1.msra.mxu0 0.0
    %700 = vmatprep.subr.mxu0 0.0
    %701 = vmatpush1.msra.mxu0 0.0
    %702 = vmatprep.subr.mxu0 0.0
    %703 = vmatpush1.msra.mxu0 0.0
    %704 = vmatprep.subr.mxu0 0.0
    %705 = vmatpush1.msra.mxu0 0.0
    %706 = vmatprep.subr.mxu0 0.0
    %707 = vmatpush1.msra.mxu0 0.0
    %708 = vmatprep.subr.mxu0 0.0
    %709 = vmatpush1.msra.mxu0 0.0
    %710 = vmatprep.subr.mxu0 0.0
    %711 = vmatpush1.msra.mxu0 0.0
    %712 = vmatprep.subr.mxu0 0.0
    %713 = vmatpush1.msra.mxu0 0.0
    %714 = vmatprep.mubr.f32.mxu0 0.0
    %715 = vmatmul.mubr.f32.gmra.mrb[0].mxu0 %v648
    %v716 = vpop.f32.mrb[0].mxu0
    %v717 = vadd.f32 0.0, %v716
    %v718 = vpop.f32.mrb[0].mxu0
    %719 = vdwg.mxu0
    %v721 = vrot.slane %v717, 6
    %v723 = vadd.f32 %v257, %v721
    %v724 = vtanh.pop %v723
    %v726 = vrot.slane %v724, 2
    %v727 = vsel %vm178, %v726, 0
    %729 = vmatprep.subr.mxu0 0.0
    %730 = vmatpush1.msra.mxu0 %v48
    %731 = vmatprep.subr.mxu0 0.0
    %732 = vmatpush1.msra.mxu0 %v49
    %733 = vmatprep.subr.mxu0 0.0
    %734 = vmatpush1.msra.mxu0 %v50
    %735 = vmatprep.subr.mxu0 0.0
    %736 = vmatpush1.msra.mxu0 %v51
    %737 = vmatprep.subr.mxu0 0.0
    %738 = vmatpush1.msra.mxu0 0.0
    %739 = vmatprep.subr.mxu0 0.0
    %740 = vmatpush1.msra.mxu0 0.0
    %741 = vmatprep.subr.mxu0 0.0
    %742 = vmatpush1.msra.mxu0 0.0
    %743 = vmatprep.subr.mxu0 0.0
    %744 = vmatpush1.msra.mxu0 0.0
    %745 = vmatprep.subr.mxu0 0.0
    %746 = vmatpush1.msra.mxu0 0.0
    %747 = vmatprep.subr.mxu0 0.0
    %748 = vmatpush1.msra.mxu0 0.0
    %749 = vmatprep.subr.mxu0 0.0
    %750 = vmatpush1.msra.mxu0 0.0
    %751 = vmatprep.subr.mxu0 0.0
    %752 = vmatpush1.msra.mxu0 0.0
    %753 = vmatprep.subr.mxu0 0.0
    %754 = vmatpush1.msra.mxu0 0.0
    %755 = vmatprep.subr.mxu0 0.0
    %756 = vmatpush1.msra.mxu0 0.0
    %757 = vmatprep.subr.mxu0 0.0
    %758 = vmatpush1.msra.mxu0 0.0
    %759 = vmatprep.subr.mxu0 0.0
    %760 = vmatpush1.msra.mxu0 0.0
    %761 = vmatprep.subr.mxu0 0.0
    %762 = vmatpush1.msra.mxu0 0.0
    %763 = vmatprep.subr.mxu0 0.0
    %764 = vmatpush1.msra.mxu0 0.0
    %765 = vmatprep.subr.mxu0 0.0
    %766 = vmatpush1.msra.mxu0 0.0
    %767 = vmatprep.subr.mxu0 0.0
    %768 = vmatpush1.msra.mxu0 0.0
    %769 = vmatprep.subr.mxu0 0.0
    %770 = vmatpush1.msra.mxu0 0.0
    %771 = vmatprep.subr.mxu0 0.0
    %772 = vmatpush1.msra.mxu0 0.0
    %773 = vmatprep.subr.mxu0 0.0
    %774 = vmatpush1.msra.mxu0 0.0
    %775 = vmatprep.subr.mxu0 0.0
    %776 = vmatpush1.msra.mxu0 0.0
    %777 = vmatprep.subr.mxu0 0.0
    %778 = vmatpush1.msra.mxu0 0.0
    %779 = vmatprep.subr.mxu0 0.0
    %780 = vmatpush1.msra.mxu0 0.0
    %781 = vmatprep.subr.mxu0 0.0
    %782 = vmatpush1.msra.mxu0 0.0
    %783 = vmatprep.subr.mxu0 0.0
    %784 = vmatpush1.msra.mxu0 0.0
    %785 = vmatprep.subr.mxu0 0.0
    %786 = vmatpush1.msra.mxu0 0.0
    %787 = vmatprep.subr.mxu0 0.0
    %788 = vmatpush1.msra.mxu0 0.0
    %789 = vmatprep.subr.mxu0 0.0
    %790 = vmatpush1.msra.mxu0 0.0
    %791 = vmatprep.subr.mxu0 0.0
    %792 = vmatpush1.msra.mxu0 0.0
    %793 = vmatprep.mubr.f32.mxu0 0.0
    %794 = vmatmul.mubr.f32.gmra.mrb[0].mxu0 %v727
    %v795 = vpop.f32.mrb[0].mxu0
    %v796 = vadd.f32 0.0, %v795
    %v797 = vpop.f32.mrb[0].mxu0
    %798 = vdwg.mxu0
    %v800 = vrot.slane %v796, 4
    %v802 = vadd.f32 %v257, %v800
    %v803 = vtanh.pop %v802
    %v805 = vrot.slane %v803, 4
    %v806 = vsel %vm178, %v805, 0
    %808 = vmatprep.subr.mxu0 0.0
    %809 = vmatpush1.msra.mxu0 %v48
    %810 = vmatprep.subr.mxu0 0.0
    %811 = vmatpush1.msra.mxu0 %v49
    %812 = vmatprep.subr.mxu0 0.0
    %813 = vmatpush1.msra.mxu0 %v50
    %814 = vmatprep.subr.mxu0 0.0
    %815 = vmatpush1.msra.mxu0 %v51
    %816 = vmatprep.subr.mxu0 0.0
    %817 = vmatpush1.msra.mxu0 0.0
    %818 = vmatprep.subr.mxu0 0.0
    %819 = vmatpush1.msra.mxu0 0.0
    %820 = vmatprep.subr.mxu0 0.0
    %821 = vmatpush1.msra.mxu0 0.0
    %822 = vmatprep.subr.mxu0 0.0
    %823 = vmatpush1.msra.mxu0 0.0
    %824 = vmatprep.subr.mxu0 0.0
    %825 = vmatpush1.msra.mxu0 0.0
    %826 = vmatprep.subr.mxu0 0.0
    %827 = vmatpush1.msra.mxu0 0.0
    %828 = vmatprep.subr.mxu0 0.0
    %829 = vmatpush1.msra.mxu0 0.0
    %830 = vmatprep.subr.mxu0 0.0
    %831 = vmatpush1.msra.mxu0 0.0
    %832 = vmatprep.subr.mxu0 0.0
    %833 = vmatpush1.msra.mxu0 0.0
    %834 = vmatprep.subr.mxu0 0.0
    %835 = vmatpush1.msra.mxu0 0.0
    %836 = vmatprep.subr.mxu0 0.0
    %837 = vmatpush1.msra.mxu0 0.0
    %838 = vmatprep.subr.mxu0 0.0
    %839 = vmatpush1.msra.mxu0 0.0
    %840 = vmatprep.subr.mxu0 0.0
    %841 = vmatpush1.msra.mxu0 0.0
    %842 = vmatprep.subr.mxu0 0.0
    %843 = vmatpush1.msra.mxu0 0.0
    %844 = vmatprep.subr.mxu0 0.0
    %845 = vmatpush1.msra.mxu0 0.0
    %846 = vmatprep.subr.mxu0 0.0
    %847 = vmatpush1.msra.mxu0 0.0
    %848 = vmatprep.subr.mxu0 0.0
    %849 = vmatpush1.msra.mxu0 0.0
    %850 = vmatprep.subr.mxu0 0.0
    %851 = vmatpush1.msra.mxu0 0.0
    %852 = vmatprep.subr.mxu0 0.0
    %853 = vmatpush1.msra.mxu0 0.0
    %854 = vmatprep.subr.mxu0 0.0
    %855 = vmatpush1.msra.mxu0 0.0
    %856 = vmatprep.subr.mxu0 0.0
    %857 = vmatpush1.msra.mxu0 0.0
    %858 = vmatprep.subr.mxu0 0.0
    %859 = vmatpush1.msra.mxu0 0.0
    %860 = vmatprep.subr.mxu0 0.0
    %861 = vmatpush1.msra.mxu0 0.0
    %862 = vmatprep.subr.mxu0 0.0
    %863 = vmatpush1.msra.mxu0 0.0
    %864 = vmatprep.subr.mxu0 0.0
    %865 = vmatpush1.msra.mxu0 0.0
    %866 = vmatprep.subr.mxu0 0.0
    %867 = vmatpush1.msra.mxu0 0.0
    %868 = vmatprep.subr.mxu0 0.0
    %869 = vmatpush1.msra.mxu0 0.0
    %870 = vmatprep.subr.mxu0 0.0
    %871 = vmatpush1.msra.mxu0 0.0
    %872 = vmatprep.mubr.f32.mxu0 0.0
    %873 = vmatmul.mubr.f32.gmra.mrb[0].mxu0 %v806
    %v874 = vpop.f32.mrb[0].mxu0
    %v875 = vadd.f32 0.0, %v874
    %v876 = vpop.f32.mrb[0].mxu0
    %877 = vdwg.mxu0
    %v879 = vrot.slane %v875, 2
    %v881 = vadd.f32 %v257, %v879
    %v882 = vtanh.pop %v881
    %vm883 = vcmask 1041408
    %v884 = vsel %vm883, %v334, %v412
    %vm885 = vcmask 1043456
    %v886 = vsel %vm885, %v884, %v491
    %vm887 = vcmask 1045504
    %v888 = vsel %vm887, %v886, %v570
    %v889 = vsel %vm883, %v646, %v724
    %v890 = vsel %vm885, %v889, %v803
    %v891 = vsel %vm887, %v890, %v882
    %892 = vst.msk [vmem:[%s7] sm:$0xff] %vm178, %v888
    %893 = vst.msk [vmem:[%s7 + $0x8] sm:$0xff] %vm178, %v891
    %v895 = vlaneseq
    %v896 = vshrl.u32 %v895, 7
    %v897 = vsub.s32 0, %v896
    %v898 = vrot.slane %v57, %v897
    %v901 = vsel %vm178, %v888, 0
    %v904 = vsel %vm178, %v891, 0
    %906 = vmatprep.subr.mxu0 0.0
    %907 = vmatpush1.msra.mxu0 %v53
    %908 = vmatprep.subr.mxu0 0.0
    %909 = vmatpush1.msra.mxu0 %v54
    %910 = vmatprep.subr.mxu0 0.0
    %911 = vmatpush1.msra.mxu0 %v55
    %912 = vmatprep.subr.mxu0 0.0
    %913 = vmatpush1.msra.mxu0 %v56
    %914 = vmatprep.subr.mxu0 0.0
    %915 = vmatpush1.msra.mxu0 0.0
    %916 = vmatprep.subr.mxu0 0.0
    %917 = vmatpush1.msra.mxu0 0.0
    %918 = vmatprep.subr.mxu0 0.0
    %919 = vmatpush1.msra.mxu0 0.0
    %920 = vmatprep.subr.mxu0 0.0
    %921 = vmatpush1.msra.mxu0 0.0
    %922 = vmatprep.subr.mxu0 0.0
    %923 = vmatpush1.msra.mxu0 0.0
    %924 = vmatprep.subr.mxu0 0.0
    %925 = vmatpush1.msra.mxu0 0.0
    %926 = vmatprep.subr.mxu0 0.0
    %927 = vmatpush1.msra.mxu0 0.0
    %928 = vmatprep.subr.mxu0 0.0
    %929 = vmatpush1.msra.mxu0 0.0
    %930 = vmatprep.subr.mxu0 0.0
    %931 = vmatpush1.msra.mxu0 0.0
    %932 = vmatprep.subr.mxu0 0.0
    %933 = vmatpush1.msra.mxu0 0.0
    %934 = vmatprep.subr.mxu0 0.0
    %935 = vmatpush1.msra.mxu0 0.0
    %936 = vmatprep.subr.mxu0 0.0
    %937 = vmatpush1.msra.mxu0 0.0
    %938 = vmatprep.subr.mxu0 0.0
    %939 = vmatpush1.msra.mxu0 0.0
    %940 = vmatprep.subr.mxu0 0.0
    %941 = vmatpush1.msra.mxu0 0.0
    %942 = vmatprep.subr.mxu0 0.0
    %943 = vmatpush1.msra.mxu0 0.0
    %944 = vmatprep.subr.mxu0 0.0
    %945 = vmatpush1.msra.mxu0 0.0
    %946 = vmatprep.subr.mxu0 0.0
    %947 = vmatpush1.msra.mxu0 0.0
    %948 = vmatprep.subr.mxu0 0.0
    %949 = vmatpush1.msra.mxu0 0.0
    %950 = vmatprep.subr.mxu0 0.0
    %951 = vmatpush1.msra.mxu0 0.0
    %952 = vmatprep.subr.mxu0 0.0
    %953 = vmatpush1.msra.mxu0 0.0
    %954 = vmatprep.subr.mxu0 0.0
    %955 = vmatpush1.msra.mxu0 0.0
    %956 = vmatprep.subr.mxu0 0.0
    %957 = vmatpush1.msra.mxu0 0.0
    %958 = vmatprep.subr.mxu0 0.0
    %959 = vmatpush1.msra.mxu0 0.0
    %960 = vmatprep.subr.mxu0 0.0
    %961 = vmatpush1.msra.mxu0 0.0
    %962 = vmatprep.subr.mxu0 0.0
    %963 = vmatpush1.msra.mxu0 0.0
    %964 = vmatprep.subr.mxu0 0.0
    %965 = vmatpush1.msra.mxu0 0.0
    %966 = vmatprep.subr.mxu0 0.0
    %967 = vmatpush1.msra.mxu0 0.0
    %968 = vmatprep.subr.mxu0 0.0
    %969 = vmatpush1.msra.mxu0 0.0
    %970 = vmatprep.mubr.f32.mxu0 0.0
    %971 = vmatmul.mubr.f32.gmra.mrb[0].mxu0 %v901
    %v972 = vpop.f32.mrb[0].mxu0
    %v973 = vadd.f32 %v898, %v972
    %v974 = vpop.f32.mrb[0].mxu0
    %975 = vmatprep.mubr.f32.mxu0 0.0
    %976 = vmatmul.mubr.f32.gmra.mrb[0].mxu0 %v904
    %v977 = vpop.f32.mrb[0].mxu0
    %v978 = vadd.f32 %v898, %v977
    %v979 = vpop.f32.mrb[0].mxu0
    %980 = vdwg.mxu0
    %v981 = vsel %vm178, %v973, -inf
    %982 = vmax.xlane.f32.xlu0 %v981
    %v983 = vpop.xlane.xlu0 %982
    %v984 = vsel %vm178, %v978, -inf
    %985 = vmax.xlane.f32.xlu0 %v984
    %v986 = vpop.xlane.xlu0 %985
    %vm987 = vcmp.eq.f32.partialorder %v973, %v983
    %vm988 = vcmp.eq.f32.partialorder %v978, %v986
    %v989 = vsel %vm987, %v165, 32
    %v990 = vsel %vm988, %v165, 32
    %v991 = vsel %vm178, %v989, 2147483647
    %v992 = vand.u32 %v991, 65535
    %v993 = vshra.s32 %v991, 16
    %v994 = vcvt.s32.f32 %v992
    %v995 = vcvt.s32.f32 %v993
    %996 = vmin.xlane.f32.xlu0 %v995
    %v997 = vpop.xlane.xlu0 %996
    %vm998 = vcmp.eq.f32.partialorder %v995, %v997
    %v999 = vsel %vm998, %v994, inf
    %1000 = vmin.xlane.f32.xlu0 %v999
    %v1001 = vpop.xlane.xlu0 %1000
    %v1002 = vcvt.f32.s32 %v1001
    %v1003 = vcvt.f32.s32 %v997
    %v1004 = vshll.u32 %v1003, 16
    %v1005 = vadd.s32 %v1004, %v1002
    %v1006 = vsel %vm178, %v990, 2147483647
    %v1007 = vand.u32 %v1006, 65535
    %v1008 = vshra.s32 %v1006, 16
    %v1009 = vcvt.s32.f32 %v1007
    %v1010 = vcvt.s32.f32 %v1008
    %1011 = vmin.xlane.f32.xlu0 %v1010
    %v1012 = vpop.xlane.xlu0 %1011
    %vm1013 = vcmp.eq.f32.partialorder %v1010, %v1012
    %v1014 = vsel %vm1013, %v1009, inf
    %1015 = vmin.xlane.f32.xlu0 %v1014
    %v1016 = vpop.xlane.xlu0 %1015
    %v1017 = vcvt.f32.s32 %v1016
    %v1018 = vcvt.f32.s32 %v1012
    %v1019 = vshll.u32 %v1018, 16
    %v1020 = vadd.s32 %v1019, %v1017
    %vm1021 = vcmask 7168
    %1022 = vst.msk [vmem:[%s8] sm:$0xff] %vm1021, %v1005
    %1023 = vst.msk [vmem:[%s8 + $0x8] sm:$0xff] %vm1021, %v1020
    // Predicated region
    $region34: #{pmodel_forward.1} parent=1 // pred_check
      _
    $region35: #{pmodel_forward.1} parent=1 // pred_check_branch
      %1025 = sbr.rel (0) target = $region37
    $region36: #{pmodel_forward.1} parent=1 // pred_region
      _
    $region37: #{pmodel_forward.1} parent=1 // pred_fallthru
      _
    // Predicated region
    $region38: #{pmodel_forward.1} parent=1 // pred_check
      _
    $region39: #{pmodel_forward.1} parent=1 // pred_check_branch
      %1027 = sbr.rel (0) target = $region41
    $region40: #{pmodel_forward.1} parent=1 // pred_region
      _
    $region41: #{pmodel_forward.1} parent=1 // pred_fallthru
      _
    // Predicated region
    $region42: #{pmodel_forward.1} parent=1 // pred_check
      _
    $region43: #{pmodel_forward.1} parent=1 // pred_check_branch
      %1029 = sbr.rel (0) target = $region45
    $region44: #{pmodel_forward.1} parent=1 // pred_region
      _
    $region45: #{pmodel_forward.1} parent=1 // pred_fallthru
      _
    // Predicated region
    $region46: #{pmodel_forward.1} parent=1 // pred_check
      _
    $region47: #{pmodel_forward.1} parent=1 // pred_check_branch
      %1031 = sbr.rel (0) target = $region49
    $region48: #{pmodel_forward.1} parent=1 // pred_region
      _
    $region49: #{pmodel_forward.1} parent=1 // pred_fallthru
      _
    %1032 = vsyncpa [#allocation3], 1

</llo_original>
